<compile_context>
chip_gen: v7x
topology: tpu7x:2x2x1
jax: 0.10.0
libtpu: 0.0.40
codegen_flags: <defaults>
</compile_context>

<pallas_src>
import functools

import jax
import jax.numpy as jnp
from jax.experimental import pallas as pl
from jax.experimental.pallas import tpu as pltpu


def _round_up(x, m):
    return ((x + m - 1) // m) * m


def _pad2(x, rows, cols):
    r, c = x.shape
    return jnp.pad(x, ((0, rows - r), (0, cols - c)))


# ---------------------------------------------------------------------------
# kg branch -> single fused-bias row (plain XLA; tiny, runs once)
# ---------------------------------------------------------------------------
def _kg_fused_bias_row(kg, params, dp):
    f32, bf16 = jnp.float32, jnp.bfloat16
    if kg.ndim == 1:
        kg = kg[None, :]
    k = jnp.dot(kg.astype(bf16), params["wk"].astype(bf16),
                preferred_element_type=f32)
    k = jnp.maximum(k + params["bk"], 0.0)
    # attention logit stays a lane reduction (never a (K, D) @ (D, 1) matmul)
    logits = jnp.sum(k * params["wa"], axis=-1, keepdims=True) + params["ba"]
    k = k * jax.nn.sigmoid(logits)
    # NOTE: kg rows are never padded here, so the mean divides by the true K.
    pooled = jnp.mean(k, axis=0, keepdims=True)
    kg_row = jnp.dot(pooled.astype(bf16), params["wf2"].astype(bf16),
                     preferred_element_type=f32) + params["bf"]
    return _pad2(kg_row, 1, dp)          # (1, dp) f32; padded lanes are exactly 0


# ---------------------------------------------------------------------------
# Main kernel: tiled over text rows; weights VMEM-resident & single-buffered
# ---------------------------------------------------------------------------
def _text_kernel(d_true, need_mask, text_ref, wt_ref, bt_ref, wf1_ref,
                 kgrow_ref, gamma_ref, beta_ref, out_ref):
    # text Linear + ReLU : bf16 operands (cast in-kernel), fp32 accumulation
    t = jnp.dot(text_ref[...].astype(wt_ref.dtype), wt_ref[...],
                preferred_element_type=jnp.float32)
    t = jnp.maximum(t + bt_ref[...], 0.0)

    # fusion Linear: relu( t @ Wf1 + (pooled_kg @ Wf2 + bf) )
    fused = jnp.dot(t.astype(wf1_ref.dtype), wf1_ref[...],
                    preferred_element_type=jnp.float32) + kgrow_ref[...]
    fused = jnp.maximum(fused, 0.0)

    # TODO(synk): dropout is identity (eval mode); training-mode mask not implemented.

    if need_mask:
        # LayerNorm over the TRUE feature width: mask BOTH mean and variance
        # sums so correctness never depends on padded lanes being zero.
        dp = fused.shape[-1]
        lane = jax.lax.broadcasted_iota(jnp.int32, (1, dp), 1)
        mask = (lane < d_true).astype(jnp.float32)
        inv_d = 1.0 / d_true
        mu = jnp.sum(fused * mask, axis=-1, keepdims=True) * inv_d
        diff = fused - mu
        var = jnp.sum(diff * diff * mask, axis=-1, keepdims=True) * inv_d
    else:
        # D is already lane-aligned: plain (cheaper) mean/var.
        mu = jnp.mean(fused, axis=-1, keepdims=True)
        diff = fused - mu
        var = jnp.mean(diff * diff, axis=-1, keepdims=True)

    inv = jax.lax.rsqrt(var + 1e-5)
    out_ref[...] = (diff * inv * gamma_ref[...] + beta_ref[...]).astype(out_ref.dtype)


# ---------------------------------------------------------------------------
# VMEM bookkeeping / tile selection
# ---------------------------------------------------------------------------
def _pass2_vmem_bytes(tm, dinp, dp, out_bytes):
    text = 2 * tm * dinp * 4              # double-buffered f32 text tile
    out = 2 * tm * dp * out_bytes         # double-buffered output tile
    weights = (dinp * dp + dp * dp) * 2   # bf16 Wt + Wf1, single-buffered
    rows = 4 * dp * 4                     # bt, kg_row, gamma, beta (f32)
    interm = 2 * tm * dp * 4              # fp32 t / fused temporaries
    return text + out + weights + rows + interm


def _choose_tm(n_pad8, dinp, dp, out_bytes, tile_m_max):
    # Keep >= 2 grid steps whenever there are enough rows (v7x has 2 TCs).
    if n_pad8 >= 16:
        cap = min(tile_m_max, _round_up(-(-n_pad8 // 2), 8))
    else:
        cap = min(tile_m_max, n_pad8)
    budget = 40 << 20     # conservative: leaves headroom under v7x's 64 MiB VMEM
    best = 8
    for tm in (8, 16, 32, 64, 128, 256, 512, 1024):
        if tm > cap:
            break
        waste = _round_up(n_pad8, tm) - n_pad8
        if waste > max(64, n_pad8 // 8):
            continue      # padded rows pay both matmuls, the LN and the store
        if _pass2_vmem_bytes(tm, dinp, dp, out_bytes) > budget:
            break
        best = tm
    return best


def _resident_spec(shape, const):
    # Constant index_map => fetched once; Buffered(1) avoids a useless second
    # buffer. Falls back to the default spec if this jax lacks pipeline_mode.
    try:
        return pl.BlockSpec(shape, const, pipeline_mode=pl.Buffered(1))
    except (AttributeError, TypeError):
        return pl.BlockSpec(shape, const)


# ---------------------------------------------------------------------------
# Wrapper
# ---------------------------------------------------------------------------
def decoupled_graph_pooling(text_features, kg_vectors, params, *,
                            tile_m_max=1024, out_dtype=jnp.float32):
    f32, bf16 = jnp.float32, jnp.bfloat16

    n, din = text_features.shape
    d = params["wt"].shape[1]

    dp = _round_up(d, 128)        # lane-dense output / fusion dims
    dinp = _round_up(din, 128)    # contraction dim of the first matmul

    # kg branch -> (1, dp) fused-bias row (tiny; plain XLA per perf review)
    kg_row = _kg_fused_bias_row(kg_vectors, params, dp)

    n_pad8 = _round_up(max(n, 8), 8)
    out_bytes = jnp.dtype(out_dtype).itemsize
    tm = _choose_tm(n_pad8, dinp, dp, out_bytes, tile_m_max)
    n_pad = _round_up(n_pad8, tm)

    # Feed f32 text (cast to bf16 inside the kernel) -> no wrapper-side cast pass.
    text_p = _pad2(text_features.astype(f32), n_pad, dinp)

    wt = _pad2(params["wt"], dinp, dp).astype(bf16)
    bt = _pad2(params["bt"], 1, dp)
    wf1 = _pad2(params["wf1"], dp, dp).astype(bf16)
    gamma = _pad2(params["gamma"], 1, dp)
    beta = _pad2(params["beta"], 1, dp)

    const = lambda i: (0, 0)
    vmem_limit = int(_pass2_vmem_bytes(tm, dinp, dp, out_bytes) * 1.25) + (8 << 20)

    out = pl.pallas_call(
        functools.partial(_text_kernel, d, d != dp),
        out_shape=jax.ShapeDtypeStruct((n_pad, dp), out_dtype),
        grid=(n_pad // tm,),
        in_specs=[
            pl.BlockSpec((tm, dinp), lambda i: (i, 0)),   # text tile (pipelined)
            _resident_spec((dinp, dp), const),            # Wt
            _resident_spec((1, dp), const),               # bt
            _resident_spec((dp, dp), const),              # Wf1
            _resident_spec((1, dp), const),               # kg_row
            _resident_spec((1, dp), const),               # gamma
            _resident_spec((1, dp), const),               # beta
        ],
        out_specs=pl.BlockSpec((tm, dp), lambda i: (i, 0)),
        compiler_params=pltpu.CompilerParams(
            dimension_semantics=("parallel",),
            vmem_limit_bytes=vmem_limit),
    )(text_p, wt, bt, wf1, kg_row, gamma, beta)

    return out[:n, :d]


# ---------------------------------------------------------------------------
# Parameters + pure-JAX references
# ---------------------------------------------------------------------------
def init_params(key, input_dim, output_dim):
    ks = jax.random.split(key, 8)
    scale = 0.05
    p = {
        "wt": scale * jax.random.normal(ks[0], (input_dim, output_dim), jnp.float32),
        "bt": scale * jax.random.normal(ks[1], (1, output_dim), jnp.float32),
        "wk": scale * jax.random.normal(ks[2], (300, output_dim), jnp.float32),
        "bk": scale * jax.random.normal(ks[3], (1, output_dim), jnp.float32),
        "wa": scale * jax.random.normal(ks[4], (1, output_dim), jnp.float32),
        "ba": scale * jax.random.normal(ks[5], (1, 1), jnp.float32),
        "bf": scale * jax.random.normal(ks[7], (1, output_dim), jnp.float32),
        "gamma": jnp.ones((1, output_dim), jnp.float32),
        "beta": jnp.zeros((1, output_dim), jnp.float32),
    }
    wf = scale * jax.random.normal(ks[6], (2 * output_dim, output_dim), jnp.float32)
    p["wf1"] = wf[:output_dim, :]
    p["wf2"] = wf[output_dim:, :]
    return p


def _reference(text, kg, p, *, matmul_dtype):
    """Pure-JAX reference (eval mode). matmul_dtype=bf16 mirrors the kernel's
    mixed precision; matmul_dtype=f32 is the exact PyTorch fp32 forward."""
    def mm(a, b):
        return jnp.dot(a.astype(matmul_dtype), b.astype(matmul_dtype),
                       preferred_element_type=jnp.float32)

    if kg.ndim == 1:
        kg = kg[None, :]
    t = jnp.maximum(mm(text, p["wt"]) + p["bt"], 0.0)
    k = jnp.maximum(mm(kg, p["wk"]) + p["bk"], 0.0)
    att = jax.nn.sigmoid(jnp.sum(k * p["wa"], axis=-1, keepdims=True) + p["ba"])
    k = k * att
    pooled = jnp.mean(k, axis=0, keepdims=True)
    fused = mm(t, p["wf1"]) + mm(pooled, p["wf2"]) + p["bf"]
    fused = jnp.maximum(fused, 0.0)
    mu = jnp.mean(fused, axis=-1, keepdims=True)
    var = jnp.mean((fused - mu) ** 2, axis=-1, keepdims=True)
    return (fused - mu) * jax.lax.rsqrt(var + 1e-5) * p["gamma"] + p["beta"]


def _check(text, kg, params, out_dim):
    out = jax.block_until_ready(decoupled_graph_pooling(text, kg, params))
    assert out.shape == (text.shape[0], out_dim)
    ref_mixed = _reference(text, kg, params, matmul_dtype=jnp.bfloat16)
    ref_fp32 = _reference(text, kg, params, matmul_dtype=jnp.float32)
    assert jnp.allclose(out, ref_mixed, atol=1e-3, rtol=1e-3), "mismatch vs mixed ref"
    assert jnp.allclose(out, ref_fp32, atol=5e-2, rtol=5e-2), "mismatch vs fp32 ref"


if __name__ == "__main__":
    key = jax.random.PRNGKey(0)
    k_text, k_kg, k_params, k_text2, k_kg2, k_params2 = jax.random.split(key, 6)

    # Case 1: small, non-lane-aligned D (exercises the masked LayerNorm path).
    input_dim, output_dim, N, K = 32, 32, 8, 8
    text_features = jax.random.normal(k_text, (N, input_dim), jnp.float32)
    kg_vectors = jax.random.normal(k_kg, (K, 300), jnp.float32)
    params = init_params(k_params, input_dim, output_dim)
    _check(text_features, kg_vectors, params, output_dim)

    # Case 1b: 1-D kg vector (module's unsqueeze path).
    _check(text_features, kg_vectors[0], params, output_dim)

    # Case 2: lane-aligned D (unmasked LN specialization) + multi-step grid.
    input_dim2, output_dim2, N2, K2 = 128, 128, 16, 4
    text2 = jax.random.normal(k_text2, (N2, input_dim2), jnp.float32)
    kg2 = jax.random.normal(k_kg2, (K2, 300), jnp.float32)
    params2 = init_params(k_params2, input_dim2, output_dim2)
    _check(text2, kg2, params2, output_dim2)

    print("KERNEL_OK")
</pallas_src>

<mosaic_0001>
module attributes {stable_mosaic.version = 11 : i64} {
  func.func @_text_kernel(%arg0: i32, %arg1: memref<8x128xf32, #tpu.memory_space<vmem>>, %arg2: memref<128x128xbf16, #tpu.memory_space<vmem>>, %arg3: memref<1x128xf32, #tpu.memory_space<vmem>>, %arg4: memref<128x128xbf16, #tpu.memory_space<vmem>>, %arg5: memref<1x128xf32, #tpu.memory_space<vmem>>, %arg6: memref<1x128xf32, #tpu.memory_space<vmem>>, %arg7: memref<1x128xf32, #tpu.memory_space<vmem>>, %arg8: memref<8x128xf32, #tpu.memory_space<vmem>>) attributes {dimension_semantics = [#tpu.dimension_semantics<parallel>], iteration_bounds = array<i64: 1>, scalar_prefetch = 0 : i64, scratch_operands = 0 : i64, tpu.core_type = #tpu.core_type<tc>, window_params = [{transform_indices = @transform_0, window_bounds = array<i64: 8, 128>}, {pipeline_mode = #tpu.pipeline_mode<synchronous>, transform_indices = @transform_1, window_bounds = array<i64: 128, 128>}, {pipeline_mode = #tpu.pipeline_mode<synchronous>, transform_indices = @transform_2, window_bounds = array<i64: 1, 128>}, {pipeline_mode = #tpu.pipeline_mode<synchronous>, transform_indices = @transform_3, window_bounds = array<i64: 128, 128>}, {pipeline_mode = #tpu.pipeline_mode<synchronous>, transform_indices = @transform_4, window_bounds = array<i64: 1, 128>}, {pipeline_mode = #tpu.pipeline_mode<synchronous>, transform_indices = @transform_5, window_bounds = array<i64: 1, 128>}, {pipeline_mode = #tpu.pipeline_mode<synchronous>, transform_indices = @transform_6, window_bounds = array<i64: 1, 128>}, {transform_indices = @transform_7, window_bounds = array<i64: 8, 128>}]} {
    %c0 = arith.constant 0 : index
    %c0_0 = arith.constant 0 : index
    %0 = vector.load %arg1[%c0, %c0_0] : memref<8x128xf32, #tpu.memory_space<vmem>>, vector<8x128xf32>
    %1 = arith.truncf %0 : vector<8x128xf32> to vector<8x128xbf16>
    %c0_1 = arith.constant 0 : index
    %c0_2 = arith.constant 0 : index
    %2 = vector.load %arg2[%c0_1, %c0_2] : memref<128x128xbf16, #tpu.memory_space<vmem>>, vector<128x128xbf16>
    %cst = arith.constant dense<0.000000e+00> : vector<8x128xf32>
    %3 = tpu.matmul %1, %2, %cst {dimension_numbers = #tpu.dot_dimension_numbers<[1], [0], [0], [1], [0, 0, 1, 1], [], []>} : vector<8x128xbf16>, vector<128x128xbf16>, vector<8x128xf32> -> vector<8x128xf32>
    %c0_3 = arith.constant 0 : index
    %c0_4 = arith.constant 0 : index
    %4 = vector.load %arg3[%c0_3, %c0_4] : memref<1x128xf32, #tpu.memory_space<vmem>>, vector<1x128xf32>
    %5 = vector.broadcast %4 : vector<1x128xf32> to vector<8x128xf32>
    %6 = arith.addf %3, %5 : vector<8x128xf32>
    %cst_5 = arith.constant 0.000000e+00 : f32
    %7 = vector.broadcast %cst_5 : f32 to vector<8x128xf32>
    %8 = arith.maximumf %6, %7 : vector<8x128xf32>
    %9 = arith.truncf %8 : vector<8x128xf32> to vector<8x128xbf16>
    %c0_6 = arith.constant 0 : index
    %c0_7 = arith.constant 0 : index
    %10 = vector.load %arg4[%c0_6, %c0_7] : memref<128x128xbf16, #tpu.memory_space<vmem>>, vector<128x128xbf16>
    %cst_8 = arith.constant dense<0.000000e+00> : vector<8x128xf32>
    %11 = tpu.matmul %9, %10, %cst_8 {dimension_numbers = #tpu.dot_dimension_numbers<[1], [0], [0], [1], [0, 0, 1, 1], [], []>} : vector<8x128xbf16>, vector<128x128xbf16>, vector<8x128xf32> -> vector<8x128xf32>
    %c0_9 = arith.constant 0 : index
    %c0_10 = arith.constant 0 : index
    %12 = vector.load %arg5[%c0_9, %c0_10] : memref<1x128xf32, #tpu.memory_space<vmem>>, vector<1x128xf32>
    %13 = vector.broadcast %12 : vector<1x128xf32> to vector<8x128xf32>
    %14 = arith.addf %11, %13 : vector<8x128xf32>
    %cst_11 = arith.constant 0.000000e+00 : f32
    %15 = vector.broadcast %cst_11 : f32 to vector<8x128xf32>
    %16 = arith.maximumf %14, %15 : vector<8x128xf32>
    %17 = tpu.iota {dimensions = array<i32: 1>} : vector<1x128xi32>
    %c32_i32 = arith.constant 32 : i32
    %18 = vector.broadcast %c32_i32 : i32 to vector<1x128xi32>
    %19 = arith.cmpi slt, %17, %18 : vector<1x128xi32>
    %20 = arith.extui %19 : vector<1x128xi1> to vector<1x128xi32>
    %21 = arith.sitofp %20 : vector<1x128xi32> to vector<1x128xf32>
    %22 = vector.broadcast %21 : vector<1x128xf32> to vector<8x128xf32>
    %23 = arith.mulf %16, %22 : vector<8x128xf32>
    %cst_12 = arith.constant dense<0.000000e+00> : vector<8xf32>
    %24 = vector.multi_reduction <add>, %23, %cst_12 [1] : vector<8x128xf32> to vector<8xf32>
    %25 = vector.shape_cast %24 : vector<8xf32> to vector<8x1xf32>
    %cst_13 = arith.constant 3.125000e-02 : f32
    %26 = vector.broadcast %cst_13 : f32 to vector<8x1xf32>
    %27 = arith.mulf %25, %26 : vector<8x1xf32>
    %28 = vector.broadcast %27 : vector<8x1xf32> to vector<8x128xf32>
    %29 = arith.subf %16, %28 : vector<8x128xf32>
    %30 = arith.mulf %29, %29 : vector<8x128xf32>
    %31 = vector.broadcast %21 : vector<1x128xf32> to vector<8x128xf32>
    %32 = arith.mulf %30, %31 : vector<8x128xf32>
    %cst_14 = arith.constant dense<0.000000e+00> : vector<8xf32>
    %33 = vector.multi_reduction <add>, %32, %cst_14 [1] : vector<8x128xf32> to vector<8xf32>
    %34 = vector.shape_cast %33 : vector<8xf32> to vector<8x1xf32>
    %cst_15 = arith.constant 3.125000e-02 : f32
    %35 = vector.broadcast %cst_15 : f32 to vector<8x1xf32>
    %36 = arith.mulf %34, %35 : vector<8x1xf32>
    %cst_16 = arith.constant 9.99999974E-6 : f32
    %37 = vector.broadcast %cst_16 : f32 to vector<8x1xf32>
    %38 = arith.addf %36, %37 : vector<8x1xf32>
    %39 = math.rsqrt %38 : vector<8x1xf32>
    %40 = vector.broadcast %39 : vector<8x1xf32> to vector<8x128xf32>
    %41 = arith.mulf %29, %40 : vector<8x128xf32>
    %c0_17 = arith.constant 0 : index
    %c0_18 = arith.constant 0 : index
    %42 = vector.load %arg6[%c0_17, %c0_18] : memref<1x128xf32, #tpu.memory_space<vmem>>, vector<1x128xf32>
    %43 = vector.broadcast %42 : vector<1x128xf32> to vector<8x128xf32>
    %44 = arith.mulf %41, %43 : vector<8x128xf32>
    %c0_19 = arith.constant 0 : index
    %c0_20 = arith.constant 0 : index
    %45 = vector.load %arg7[%c0_19, %c0_20] : memref<1x128xf32, #tpu.memory_space<vmem>>, vector<1x128xf32>
    %46 = vector.broadcast %45 : vector<1x128xf32> to vector<8x128xf32>
    %47 = arith.addf %44, %46 : vector<8x128xf32>
    %c0_21 = arith.constant 0 : index
    %c0_22 = arith.constant 0 : index
    %48 = vector.load %arg8[%c0_21, %c0_22] : memref<8x128xf32, #tpu.memory_space<vmem>>, vector<8x128xf32>
    tpu.vector_store %arg8[%c0_21, %c0_22], %47 {strides = array<i32>} : memref<8x128xf32, #tpu.memory_space<vmem>>, vector<8x128xf32>,
    return
  }
  func.func @transform_0(%arg0: i32) -> (i32, i32) {
    %c0_i32 = arith.constant 0 : i32
    %c0_i32_0 = arith.constant 0 : i32
    return %arg0, %c0_i32 : i32, i32
  }
  func.func @transform_1(%arg0: i32) -> (i32, i32) {
    %c0_i32 = arith.constant 0 : i32
    %c0_i32_0 = arith.constant 0 : i32
    %c0_i32_1 = arith.constant 0 : i32
    return %c0_i32, %c0_i32_0 : i32, i32
  }
  func.func @transform_2(%arg0: i32) -> (i32, i32) {
    %c0_i32 = arith.constant 0 : i32
    %c0_i32_0 = arith.constant 0 : i32
    %c0_i32_1 = arith.constant 0 : i32
    return %c0_i32, %c0_i32_0 : i32, i32
  }
  func.func @transform_3(%arg0: i32) -> (i32, i32) {
    %c0_i32 = arith.constant 0 : i32
    %c0_i32_0 = arith.constant 0 : i32
    %c0_i32_1 = arith.constant 0 : i32
    return %c0_i32, %c0_i32_0 : i32, i32
  }
  func.func @transform_4(%arg0: i32) -> (i32, i32) {
    %c0_i32 = arith.constant 0 : i32
    %c0_i32_0 = arith.constant 0 : i32
    %c0_i32_1 = arith.constant 0 : i32
    return %c0_i32, %c0_i32_0 : i32, i32
  }
  func.func @transform_5(%arg0: i32) -> (i32, i32) {
    %c0_i32 = arith.constant 0 : i32
    %c0_i32_0 = arith.constant 0 : i32
    %c0_i32_1 = arith.constant 0 : i32
    return %c0_i32, %c0_i32_0 : i32, i32
  }
  func.func @transform_6(%arg0: i32) -> (i32, i32) {
    %c0_i32 = arith.constant 0 : i32
    %c0_i32_0 = arith.constant 0 : i32
    %c0_i32_1 = arith.constant 0 : i32
    return %c0_i32, %c0_i32_0 : i32, i32
  }
  func.func @transform_7(%arg0: i32) -> (i32, i32) {
    %c0_i32 = arith.constant 0 : i32
    %c0_i32_0 = arith.constant 0 : i32
    return %arg0, %c0_i32 : i32, i32
  }
}

</mosaic_0001>

<llo_original>
// kernel: tpu_custom_call.1
$region0: #{tpu_custom_call.1}
  #allocation0 [shape = 'u32[]', space=smem, size = 0x4, offset = 0x4, fixed_abs, tag = 'smem constant byte address 0x4 - core index']
  #allocation1 [shape = 'u32[144,128]{1,0:T(1,128)}', space=vmem, size = 0x12000, scoped, tag = 'internal scratch']
  %s0 = inlined_call_operand.hbm [shape: f32[8,128], index: 0, kind: input, shape index: {}]
  %s1 = inlined_call_operand.hbm [shape: bf16[128,128], index: 1, kind: input, shape index: {}]
  %s2 = inlined_call_operand.vmem [shape: f32[1,128], index: 2, kind: input, shape index: {}]
  %s3 = inlined_call_operand.hbm [shape: bf16[128,128], index: 3, kind: input, shape index: {}]
  %s4 = inlined_call_operand.vmem [shape: f32[1,128], index: 4, kind: input, shape index: {}]
  %s5 = inlined_call_operand.vmem [shape: f32[1,128], index: 5, kind: input, shape index: {}]
  %s6 = inlined_call_operand.vmem [shape: f32[1,128], index: 6, kind: input, shape index: {}]
  %s7 = inlined_call_operand.hbm [shape: f32[8,128], index: 7, kind: output, shape index: {}]
  %s8 = sld [smem:[#allocation0]]
  $region50: #{tpu_custom_call.1} parent=0
    _
  %s10 = ssub.s32 1, %s8
  %s11 = scalar_select 0, %s10, %s8
  $region1: #{tpu_custom_call.1} parent=0
    #allocation2 [shape = 'u8[4096]{0}', space=vmem, size = 0x1000, scoped, tag = 'input window, operand 0, single buffered']
    #allocation3 [shape = 's32[1]{0}', space=sflag, size = 0x4, scoped, tag = 'scoped memory for tpu_custom_call.1']
    #allocation4 [shape = 's32[1]{0}', space=sflag, size = 0x4, scoped, tag = 'scoped memory for tpu_custom_call.1']
    #allocation5 [shape = 'u8[32768]{0}', space=vmem, size = 0x8000, scoped, tag = 'input window, operand 1, single buffered']
    #allocation6 [shape = 's32[1]{0}', space=sflag, size = 0x4, scoped, tag = 'scoped memory for tpu_custom_call.1']
    #allocation7 [shape = 'u8[32768]{0}', space=vmem, size = 0x8000, scoped, tag = 'input window, operand 3, single buffered']
    #allocation8 [shape = 'u8[4096]{0}', space=vmem, size = 0x1000, scoped, tag = 'output window, operand 0, single buffered']
    %12 = vsyncpa [#allocation3], 0
    %13 = vsyncpa [#allocation6], 0
    %14 = vsyncpa [#allocation4], 0
    // Predicated region
    $region2: #{tpu_custom_call.1} parent=1 // pred_check
      _
    $region3: #{tpu_custom_call.1} parent=1 // pred_check_branch
      %16 = sbr.rel (0) target = $region5
    $region4: #{tpu_custom_call.1} parent=1 // pred_region
      %s18 = ssub.s32 128, 128
      %19 = vsyncadd [#allocation3], %s18
      %s21 = sshll.u32 [#allocation2], 4
      %s22 = int_to_ptr.vmem [resolvable:$true] %s21
      %24 = dma.hbm_to_vmem [thread:$0]  %s0, 128, %s22, [#allocation3]
    $region5: #{tpu_custom_call.1} parent=1 // pred_fallthru
      _
    // Predicated region
    $region6: #{tpu_custom_call.1} parent=1 // pred_check
      _
    $region7: #{tpu_custom_call.1} parent=1 // pred_check_branch
      %26 = sbr.rel (0) target = $region9
    $region8: #{tpu_custom_call.1} parent=1 // pred_region
      %s28 = ssub.s32 1024, 1024
      %29 = vsyncadd [#allocation6], %s28
      %s30 = sshll.u32 [#allocation5], 4
      %s31 = int_to_ptr.vmem [resolvable:$true] %s30
      %36 = dma.hbm_to_vmem [thread:$0]  %s1, 1024, %s31, [#allocation6], 64, 64, 4
    $region9: #{tpu_custom_call.1} parent=1 // pred_fallthru
      _
    // Predicated region
    $region10: #{tpu_custom_call.1} parent=1 // pred_check
      _
    $region11: #{tpu_custom_call.1} parent=1 // pred_check_branch
      %38 = sbr.rel (0) target = $region13
    $region12: #{tpu_custom_call.1} parent=1 // pred_region
      _
    $region13: #{tpu_custom_call.1} parent=1 // pred_fallthru
      _
    // Predicated region
    $region14: #{tpu_custom_call.1} parent=1 // pred_check
      _
    $region15: #{tpu_custom_call.1} parent=1 // pred_check_branch
      %40 = sbr.rel (0) target = $region17
    $region16: #{tpu_custom_call.1} parent=1 // pred_region
      %s42 = ssub.s32 1024, 1024
      %43 = vsyncadd [#allocation6], %s42
      %s44 = sshll.u32 [#allocation7], 4
      %s45 = int_to_ptr.vmem [resolvable:$true] %s44
      %50 = dma.hbm_to_vmem [thread:$0]  %s3, 1024, %s45, [#allocation6], 64, 64, 4
    $region17: #{tpu_custom_call.1} parent=1 // pred_fallthru
      _
    // Predicated region
    $region18: #{tpu_custom_call.1} parent=1 // pred_check
      _
    $region19: #{tpu_custom_call.1} parent=1 // pred_check_branch
      %52 = sbr.rel (0) target = $region21
    $region20: #{tpu_custom_call.1} parent=1 // pred_region
      _
    $region21: #{tpu_custom_call.1} parent=1 // pred_fallthru
      _
    // Predicated region
    $region22: #{tpu_custom_call.1} parent=1 // pred_check
      _
    $region23: #{tpu_custom_call.1} parent=1 // pred_check_branch
      %54 = sbr.rel (0) target = $region25
    $region24: #{tpu_custom_call.1} parent=1 // pred_region
      _
    $region25: #{tpu_custom_call.1} parent=1 // pred_fallthru
      _
    // Predicated region
    $region26: #{tpu_custom_call.1} parent=1 // pred_check
      _
    $region27: #{tpu_custom_call.1} parent=1 // pred_check_branch
      %56 = sbr.rel (0) target = $region29
    $region28: #{tpu_custom_call.1} parent=1 // pred_region
      _
    $region29: #{tpu_custom_call.1} parent=1 // pred_fallthru
      _
    // Predicated region
    $region30: #{tpu_custom_call.1} parent=1 // pred_check
      _
    $region31: #{tpu_custom_call.1} parent=1 // pred_check_branch
      %58 = sbr.rel (0) target = $region33
    $region32: #{tpu_custom_call.1} parent=1 // pred_region
      %59 = dma.done [#allocation3], 128
    $region33: #{tpu_custom_call.1} parent=1 // pred_fallthru
      _
    // Predicated region
    $region34: #{tpu_custom_call.1} parent=1 // pred_check
      _
    $region35: #{tpu_custom_call.1} parent=1 // pred_check_branch
      %61 = sbr.rel (0) target = $region37
    $region36: #{tpu_custom_call.1} parent=1 // pred_region
      %62 = dma.done [#allocation6], 1024
    $region37: #{tpu_custom_call.1} parent=1 // pred_fallthru
      _
    // Predicated region
    $region38: #{tpu_custom_call.1} parent=1 // pred_check
      _
    $region39: #{tpu_custom_call.1} parent=1 // pred_check_branch
      %64 = sbr.rel (0) target = $region41
    $region40: #{tpu_custom_call.1} parent=1 // pred_region
      %65 = dma.done [#allocation6], 1024
    $region41: #{tpu_custom_call.1} parent=1 // pred_fallthru
      _
    %v67 = vld [vmem:[#allocation2] sm:$0xff]
    %v68 = vpack.c.bf16 %v67, %v67
    %v69 = vld [vmem:[#allocation5] sm:$0xf]
    %v70 = vld [vmem:[#allocation5 + $0x4] sm:$0xf]
    %v71 = vld [vmem:[#allocation5 + $0x8] sm:$0xf]
    %v72 = vld [vmem:[#allocation5 + $0xc] sm:$0xf]
    %v73 = vld [vmem:[#allocation5 + $0x10] sm:$0xf]
    %v74 = vld [vmem:[#allocation5 + $0x14] sm:$0xf]
    %v75 = vld [vmem:[#allocation5 + $0x18] sm:$0xf]
    %v76 = vld [vmem:[#allocation5 + $0x1c] sm:$0xf]
    %v77 = vld [vmem:[#allocation5 + $0x20] sm:$0xf]
    %v78 = vld [vmem:[#allocation5 + $0x24] sm:$0xf]
    %v79 = vld [vmem:[#allocation5 + $0x28] sm:$0xf]
    %v80 = vld [vmem:[#allocation5 + $0x2c] sm:$0xf]
    %v81 = vld [vmem:[#allocation5 + $0x30] sm:$0xf]
    %v82 = vld [vmem:[#allocation5 + $0x34] sm:$0xf]
    %v83 = vld [vmem:[#allocation5 + $0x38] sm:$0xf]
    %v84 = vld [vmem:[#allocation5 + $0x3c] sm:$0xf]
    %v85 = vld [vmem:[%s2] sm:$0x1]
    %v87 = vlaneseq
    %v88 = vshrl.u32 %v87, 7
    %v89 = vsub.s32 0, %v88
    %v90 = vrot.slane %v85, %v89
    %v108 = vunpack.c.l.b16 %v69
    %v109 = vunpack.c.l.b16 %v70
    %v110 = vunpack.c.l.b16 %v71
    %v111 = vunpack.c.l.b16 %v72
    %v112 = vunpack.c.l.b16 %v73
    %v113 = vunpack.c.l.b16 %v74
    %v114 = vunpack.c.l.b16 %v75
    %v115 = vunpack.c.l.b16 %v76
    %v116 = vunpack.c.l.b16 %v77
    %v117 = vunpack.c.l.b16 %v78
    %v118 = vunpack.c.l.b16 %v79
    %v119 = vunpack.c.l.b16 %v80
    %v120 = vunpack.c.l.b16 %v81
    %v121 = vunpack.c.l.b16 %v82
    %v122 = vunpack.c.l.b16 %v83
    %v123 = vunpack.c.l.b16 %v84
    %v124 = vpack.c.b16 %v109, %v108
    %v125 = vpack.c.b16 %v111, %v110
    %v126 = vpack.c.b16 %v113, %v112
    %v127 = vpack.c.b16 %v115, %v114
    %v128 = vpack.c.b16 %v117, %v116
    %v129 = vpack.c.b16 %v119, %v118
    %v130 = vpack.c.b16 %v121, %v120
    %v131 = vpack.c.b16 %v123, %v122
    %140 = vmatprep.subr.bf16.mxu0 0
    %141 = vmatpush1.bf16.msra.mxu0 %v124
    %142 = vmatprep.subr.bf16.mxu0 0
    %143 = vmatpush1.bf16.msra.mxu0 %v125
    %144 = vmatprep.subr.bf16.mxu0 0
    %145 = vmatpush1.bf16.msra.mxu0 %v126
    %146 = vmatprep.subr.bf16.mxu0 0
    %147 = vmatpush1.bf16.msra.mxu0 %v127
    %148 = vmatprep.subr.bf16.mxu0 0
    %149 = vmatpush1.bf16.msra.mxu0 %v128
    %150 = vmatprep.subr.bf16.mxu0 0
    %151 = vmatpush1.bf16.msra.mxu0 %v129
    %152 = vmatprep.subr.bf16.mxu0 0
    %153 = vmatpush1.bf16.msra.mxu0 %v130
    %154 = vmatprep.subr.bf16.mxu0 0
    %155 = vmatpush1.bf16.msra.mxu0 %v131
    %156 = vmatprep.subr.bf16.mxu0 0
    %157 = vmatpush1.bf16.msra.mxu0 0
    %158 = vmatprep.subr.bf16.mxu0 0
    %159 = vmatpush1.bf16.msra.mxu0 0
    %160 = vmatprep.subr.bf16.mxu0 0
    %161 = vmatpush1.bf16.msra.mxu0 0
    %162 = vmatprep.subr.bf16.mxu0 0
    %163 = vmatpush1.bf16.msra.mxu0 0
    %164 = vmatprep.subr.bf16.mxu0 0
    %165 = vmatpush1.bf16.msra.mxu0 0
    %166 = vmatprep.subr.bf16.mxu0 0
    %167 = vmatpush1.bf16.msra.mxu0 0
    %168 = vmatprep.subr.bf16.mxu0 0
    %169 = vmatpush1.bf16.msra.mxu0 0
    %170 = vmatprep.subr.bf16.mxu0 0
    %171 = vmatpush1.bf16.msra.mxu0 0
    %172 = vmatprep.mubr.bf16.mxu0 0
    %173 = vmatmul.mubr.bf16.gmra.mrb[0].mxu0 %v68
    %v174 = vpop.f32.mrb[0].mxu0
    %v175 = vadd.f32 %v90, %v174
    %v176 = vpop.f32.mrb[0].mxu0
    %v177 = vpop.f32.mrb[0].mxu0
    %v178 = vpop.f32.mrb[0].mxu0
    %179 = vdwg.mxu0
    %v180 = vmax.f32 %v175, 0.0
    %v181 = vpack.c.bf16 %v180, %v180
    %v182 = vld [vmem:[#allocation7] sm:$0xf]
    %v183 = vld [vmem:[#allocation7 + $0x4] sm:$0xf]
    %v184 = vld [vmem:[#allocation7 + $0x8] sm:$0xf]
    %v185 = vld [vmem:[#allocation7 + $0xc] sm:$0xf]
    %v186 = vld [vmem:[#allocation7 + $0x10] sm:$0xf]
    %v187 = vld [vmem:[#allocation7 + $0x14] sm:$0xf]
    %v188 = vld [vmem:[#allocation7 + $0x18] sm:$0xf]
    %v189 = vld [vmem:[#allocation7 + $0x1c] sm:$0xf]
    %v190 = vld [vmem:[#allocation7 + $0x20] sm:$0xf]
    %v191 = vld [vmem:[#allocation7 + $0x24] sm:$0xf]
    %v192 = vld [vmem:[#allocation7 + $0x28] sm:$0xf]
    %v193 = vld [vmem:[#allocation7 + $0x2c] sm:$0xf]
    %v194 = vld [vmem:[#allocation7 + $0x30] sm:$0xf]
    %v195 = vld [vmem:[#allocation7 + $0x34] sm:$0xf]
    %v196 = vld [vmem:[#allocation7 + $0x38] sm:$0xf]
    %v197 = vld [vmem:[#allocation7 + $0x3c] sm:$0xf]
    %v198 = vld [vmem:[%s4] sm:$0x1]
    %v200 = vlaneseq
    %v201 = vshrl.u32 %v200, 7
    %v202 = vsub.s32 0, %v201
    %v203 = vrot.slane %v198, %v202
    %v221 = vunpack.c.l.b16 %v182
    %v222 = vunpack.c.l.b16 %v183
    %v223 = vunpack.c.l.b16 %v184
    %v224 = vunpack.c.l.b16 %v185
    %v225 = vunpack.c.l.b16 %v186
    %v226 = vunpack.c.l.b16 %v187
    %v227 = vunpack.c.l.b16 %v188
    %v228 = vunpack.c.l.b16 %v189
    %v229 = vunpack.c.l.b16 %v190
    %v230 = vunpack.c.l.b16 %v191
    %v231 = vunpack.c.l.b16 %v192
    %v232 = vunpack.c.l.b16 %v193
    %v233 = vunpack.c.l.b16 %v194
    %v234 = vunpack.c.l.b16 %v195
    %v235 = vunpack.c.l.b16 %v196
    %v236 = vunpack.c.l.b16 %v197
    %v237 = vpack.c.b16 %v222, %v221
    %v238 = vpack.c.b16 %v224, %v223
    %v239 = vpack.c.b16 %v226, %v225
    %v240 = vpack.c.b16 %v228, %v227
    %v241 = vpack.c.b16 %v230, %v229
    %v242 = vpack.c.b16 %v232, %v231
    %v243 = vpack.c.b16 %v234, %v233
    %v244 = vpack.c.b16 %v236, %v235
    %253 = vmatprep.subr.bf16.mxu0 0
    %254 = vmatpush1.bf16.msra.mxu0 %v237
    %255 = vmatprep.subr.bf16.mxu0 0
    %256 = vmatpush1.bf16.msra.mxu0 %v238
    %257 = vmatprep.subr.bf16.mxu0 0
    %258 = vmatpush1.bf16.msra.mxu0 %v239
    %259 = vmatprep.subr.bf16.mxu0 0
    %260 = vmatpush1.bf16.msra.mxu0 %v240
    %261 = vmatprep.subr.bf16.mxu0 0
    %262 = vmatpush1.bf16.msra.mxu0 %v241
    %263 = vmatprep.subr.bf16.mxu0 0
    %264 = vmatpush1.bf16.msra.mxu0 %v242
    %265 = vmatprep.subr.bf16.mxu0 0
    %266 = vmatpush1.bf16.msra.mxu0 %v243
    %267 = vmatprep.subr.bf16.mxu0 0
    %268 = vmatpush1.bf16.msra.mxu0 %v244
    %269 = vmatprep.subr.bf16.mxu0 0
    %270 = vmatpush1.bf16.msra.mxu0 0
    %271 = vmatprep.subr.bf16.mxu0 0
    %272 = vmatpush1.bf16.msra.mxu0 0
    %273 = vmatprep.subr.bf16.mxu0 0
    %274 = vmatpush1.bf16.msra.mxu0 0
    %275 = vmatprep.subr.bf16.mxu0 0
    %276 = vmatpush1.bf16.msra.mxu0 0
    %277 = vmatprep.subr.bf16.mxu0 0
    %278 = vmatpush1.bf16.msra.mxu0 0
    %279 = vmatprep.subr.bf16.mxu0 0
    %280 = vmatpush1.bf16.msra.mxu0 0
    %281 = vmatprep.subr.bf16.mxu0 0
    %282 = vmatpush1.bf16.msra.mxu0 0
    %283 = vmatprep.subr.bf16.mxu0 0
    %284 = vmatpush1.bf16.msra.mxu0 0
    %285 = vmatprep.mubr.bf16.mxu0 0
    %286 = vmatmul.mubr.bf16.gmra.mrb[0].mxu0 %v181
    %v287 = vpop.f32.mrb[0].mxu0
    %v288 = vadd.f32 %v203, %v287
    %v289 = vpop.f32.mrb[0].mxu0
    %v290 = vpop.f32.mrb[0].mxu0
    %v291 = vpop.f32.mrb[0].mxu0
    %292 = vdwg.mxu0
    %v293 = vmax.f32 %v288, 0.0
    %v294 = vlaneseq
    %v295 = vand.u32 %v294, 127
    %vm296 = vcmp.lt.s32.totalorder %v295, 32
    %v297 = vsel %vm296, 1, 0
    %v298 = vcvt.s32.f32 %v297
    %v299 = vmul.f32 %v293, %v298
    %300 = vadd.xlane.f32.xlu0 %v299
    %v301 = vpop.xlane.xlu0 %300
    %v302 = vmul.f32 %v301, 0.03125
    %v303 = vsub.f32 %v293, %v302
    %v304 = vmul.f32 %v303, %v303
    %v305 = vmul.f32 %v304, %v298
    %306 = vadd.xlane.f32.xlu0 %v305
    %v307 = vpop.xlane.xlu0 %306
    %v308 = vmul.f32 %v307, 0.03125
    %v309 = vadd.f32 %v308, 1e-05
    %v310 = vrsqrt.pop %v309
    %v311 = vmul.f32 %v303, %v310
    %v312 = vld [vmem:[%s5] sm:$0x1]
    %v314 = vlaneseq
    %v315 = vshrl.u32 %v314, 7
    %v316 = vsub.s32 0, %v315
    %v317 = vrot.slane %v312, %v316
    %v319 = vmul.f32 %v311, %v317
    %v320 = vld [vmem:[%s6] sm:$0x1]
    %v322 = vlaneseq
    %v323 = vshrl.u32 %v322, 7
    %v324 = vsub.s32 0, %v323
    %v325 = vrot.slane %v320, %v324
    %v327 = vadd.f32 %v319, %v325
    %328 = vst [vmem:[#allocation8] sm:$0xff] %v327
    // Predicated region
    $region42: #{tpu_custom_call.1} parent=1 // pred_check
      _
    $region43: #{tpu_custom_call.1} parent=1 // pred_check_branch
      %330 = sbr.rel (0) target = $region45
    $region44: #{tpu_custom_call.1} parent=1 // pred_region
      %s332 = ssub.s32 128, 128
      %333 = vsyncadd [#allocation4], %s332
      %s335 = sshll.u32 [#allocation8], 4
      %s336 = int_to_ptr.vmem [resolvable:$true] %s335
      %338 = dma.vmem_to_hbm [thread:$0]  %s336, 128, %s7, [#allocation4]
    $region45: #{tpu_custom_call.1} parent=1 // pred_fallthru
      _
    // Predicated region
    $region46: #{tpu_custom_call.1} parent=1 // pred_check
      _
    $region47: #{tpu_custom_call.1} parent=1 // pred_check_branch
      %340 = sbr.rel (0) target = $region49
    $region48: #{tpu_custom_call.1} parent=1 // pred_region
      %341 = dma.done [#allocation4], 128
    $region49: #{tpu_custom_call.1} parent=1 // pred_fallthru
      _
    %342 = vsyncpa [#allocation3], 1
    %343 = vsyncpa [#allocation6], 1
    %344 = vsyncpa [#allocation4], 1

</llo_original>
